<compile_context>
chip_gen: v7x
topology: tpu7x:2x2x1
jax: 0.10.0
libtpu: 0.0.40
codegen_flags: <defaults>
</compile_context>

<pallas_src>
import functools

import jax
import jax.numpy as jnp
from jax import lax
from jax.experimental import pallas as pl
from jax.experimental.pallas import tpu as pltpu


def _round_up(x: int, m: int) -> int:
    return ((x + m - 1) // m) * m


def _largest_divisor_leq(n: int, cap: int, multiple: int) -> int:
    """Largest d with d | n, d <= cap and multiple | d (falls back to n)."""
    for d in range(min(cap, n), 0, -1):
        if n % d == 0 and d % multiple == 0:
            return d
    return n


# ---------------------------------------------------------------------------
# Kernel 1: hoisted input projection  Zx = X @ Wx_packed + b_packed
#   Tiled over the T*B rows so DMA/MXU pipeline and VMEM limits are respected.
# ---------------------------------------------------------------------------
def _input_proj_kernel(x_ref, wx_ref, b_ref, zx_ref):
    acc = jnp.dot(x_ref[...], wx_ref[...], preferred_element_type=jnp.float32)
    zx_ref[...] = (acc + b_ref[...]).astype(zx_ref.dtype)


# ---------------------------------------------------------------------------
# Kernel 2: fused recurrence.  One grid step == Tc timesteps.
# ---------------------------------------------------------------------------
def _lstm_recurrence_kernel(zx_ref, wh_ref, h_ref, c_ref, *,
                            hidden_pad, time_chunk, seq_len, matmul_dtype):
    """zx_ref: (Tc, Bp, 2*Hp)   wh_ref: (Hp, 2*Hp) resident in VMEM
    h_ref / c_ref: (Bp, Hp) outputs with a constant block index across the
    (arbitrary) time-chunk axis -> they stay VMEM-resident and double as the
    recurrent carry; HBM writeback happens once at the end.
    """
    chunk = pl.program_id(0)

    @pl.when(chunk == 0)
    def _init():                      # start=True semantics: h = c = 0
        h_ref[...] = jnp.zeros_like(h_ref)
        c_ref[...] = jnp.zeros_like(c_ref)

    ragged = (seq_len % time_chunk) != 0

    def step(i, carry):
        def cell():
            h = h_ref[...]
            c = c_ref[...]
            # Only this recurrent matmul sits on the serial critical path.
            z = zx_ref[i].astype(jnp.float32) + jnp.dot(
                h.astype(matmul_dtype), wh_ref[...],
                preferred_element_type=jnp.float32)
            # Gate split sits exactly on the 128-lane boundary (hidden_pad).
            g_out = jnp.tanh(z[:, :hidden_pad])          # modulation gate
            sig_i = jax.nn.sigmoid(z[:, hidden_pad:])    # i == f == o (ref bug)
            c_new = sig_i * (g_out + c)                  # factored cell update
            h_new = jnp.tanh(c_new) * sig_i
            h_ref[...] = h_new
            c_ref[...] = c_new

        if ragged:
            pl.when(chunk * time_chunk + i < seq_len)(cell)
        else:
            cell()
        return carry

    lax.fori_loop(0, time_chunk, step, 0, unroll=True)


# ---------------------------------------------------------------------------
# Wrapper: full-sequence forward pass (start=True at t=0).
# ---------------------------------------------------------------------------
def lstm_forward(xs, wx, wh, b, *,
                 matmul_dtype=jnp.bfloat16,
                 time_chunk=16,
                 proj_row_block=512):
    """xs: (T, B, D) f32;  wx: (D, 4H);  wh: (H, 4H);  b: (4H,).
    Gate column order: [modulation(g), input(i), forget(f), output(o)].
    Returns (h_final, c_final), each (B, H) f32.
    """
    seq_len, batch, input_dim = xs.shape
    hidden = wh.shape[0]
    assert wx.shape == (input_dim, 4 * hidden)
    assert b.shape == (4 * hidden,)

    hp = _round_up(hidden, 128)           # lane-dense hidden
    bp = _round_up(batch, 8)              # sublane-dense batch
    h2p = 2 * hp
    tc = min(time_chunk, seq_len)
    seq_pad = _round_up(seq_len, tc)

    # ---- pack live gate columns [g | pad | i | pad]; zero-pad Wh rows ------
    def pack_cols(w):
        out = jnp.zeros((w.shape[0], h2p), jnp.float32)
        out = out.at[:, :hidden].set(w[:, 0 * hidden:1 * hidden])          # g
        out = out.at[:, hp:hp + hidden].set(w[:, 1 * hidden:2 * hidden])   # i
        return out

    wx_p = pack_cols(wx).astype(matmul_dtype)                              # (D, 2Hp)
    wh_p = jnp.zeros((hp, h2p), jnp.float32)
    wh_p = wh_p.at[:hidden].set(pack_cols(wh)).astype(matmul_dtype)        # (Hp, 2Hp)
    b_p = jnp.zeros((1, h2p), jnp.float32)
    b_p = b_p.at[0, :hidden].set(b[0 * hidden:1 * hidden])
    b_p = b_p.at[0, hp:hp + hidden].set(b[1 * hidden:2 * hidden])

    # ---- pad batch (sublanes) and time (chunking); pads stay mathematically inert
    xs_p = jnp.pad(xs, ((0, seq_pad - seq_len), (0, bp - batch), (0, 0)))

    # ---- Phase 1: batched input projection (outside the serial chain) ------
    rows = seq_pad * bp
    rb = _largest_divisor_leq(rows, proj_row_block, 8)
    xs2d = xs_p.reshape(rows, input_dim).astype(matmul_dtype)
    zx = pl.pallas_call(
        _input_proj_kernel,
        out_shape=jax.ShapeDtypeStruct((rows, h2p), matmul_dtype),
        grid_spec=pltpu.PrefetchScalarGridSpec(
            num_scalar_prefetch=0,
            grid=(rows // rb,),
            in_specs=[
                pl.BlockSpec((rb, input_dim), lambda r: (r, 0)),
                pl.BlockSpec((input_dim, h2p), lambda r: (0, 0)),
                pl.BlockSpec((1, h2p), lambda r: (0, 0)),
            ],
            out_specs=pl.BlockSpec((rb, h2p), lambda r: (r, 0)),
        ),
        compiler_params=pltpu.CompilerParams(
            dimension_semantics=("parallel",),
            vmem_limit_bytes=32 * 1024 * 1024),
    )(xs2d, wx_p, b_p)
    zx3d = zx.reshape(seq_pad, bp, h2p)
    # TODO(synk): for very long sequences, fuse x@Wx into the recurrence
    # (resident Wx, stream xs per chunk) to avoid the zx HBM round trip.

    # ---- Phase 2: fused recurrence over time chunks, Wh resident -----------
    # TODO(synk): on v7x, give the resident-Wh BlockSpec pipeline_mode=pl.Buffered(1)
    # (its index map is constant) and run the two bi-LSTM directions on the two
    # TensorCores for ~2x.
    h_out, c_out = pl.pallas_call(
        functools.partial(_lstm_recurrence_kernel,
                          hidden_pad=hp, time_chunk=tc, seq_len=seq_len,
                          matmul_dtype=matmul_dtype),
        out_shape=(
            jax.ShapeDtypeStruct((bp, hp), jnp.float32),
            jax.ShapeDtypeStruct((bp, hp), jnp.float32),
        ),
        grid_spec=pltpu.PrefetchScalarGridSpec(
            num_scalar_prefetch=0,
            grid=(seq_pad // tc,),
            in_specs=[
                pl.BlockSpec((tc, bp, h2p), lambda t: (t, 0, 0)),   # Zx chunk
                pl.BlockSpec((hp, h2p), lambda t: (0, 0)),          # resident Wh
            ],
            out_specs=(
                pl.BlockSpec((bp, hp), lambda t: (0, 0)),
                pl.BlockSpec((bp, hp), lambda t: (0, 0)),
            ),
        ),
        compiler_params=pltpu.CompilerParams(
            dimension_semantics=("arbitrary",),    # true sequential recurrence
            vmem_limit_bytes=32 * 1024 * 1024),
    )(zx3d, wh_p)

    return h_out[:batch, :hidden], c_out[:batch, :hidden]


# ---------------------------------------------------------------------------
# Parameter init mimicking the PyTorch module (kaiming_normal_, zero biases)
# ---------------------------------------------------------------------------
def init_params(key, input_dim, hidden_dim):
    ks = jax.random.split(key, 8)
    std = (2.0 / hidden_dim) ** 0.5

    def mat(k, shape):
        return std * jax.random.normal(k, shape, dtype=jnp.float32)

    # gate order: modulation(g), input(i), forget(f), output(o)
    wx = jnp.concatenate([mat(ks[i], (input_dim, hidden_dim)) for i in range(4)],
                         axis=1)                              # (D, 4H)
    wh = jnp.concatenate([mat(ks[4 + i], (hidden_dim, hidden_dim)) for i in range(4)],
                         axis=1)                              # (H, 4H)
    b = jnp.zeros((4 * hidden_dim,), dtype=jnp.float32)
    return wx, wh, b


# ---------------------------------------------------------------------------
# Pure-JAX reference, faithful to the PyTorch forward (bug included)
# ---------------------------------------------------------------------------
def reference_step(x, h, c, wx, wh, b):
    H = h.shape[1]
    hi = jax.lax.Precision.HIGHEST
    z = jnp.dot(x, wx, precision=hi) + jnp.dot(h, wh, precision=hi) + b[None, :]
    g_out = jnp.tanh(z[:, 0 * H:1 * H])
    i_in = z[:, 1 * H:2 * H]
    i_out = jax.nn.sigmoid(i_in)
    f_out = jax.nn.sigmoid(i_in)   # PyTorch reference reuses i_input here
    o_out = jax.nn.sigmoid(i_in)   # PyTorch reference reuses i_input here
    c_new = g_out * i_out + f_out * c
    h_new = jnp.tanh(c_new) * o_out
    return h_new, c_new


if __name__ == "__main__":
    batch, input_dim, hidden_dim, seq_len = 8, 16, 32, 8

    key = jax.random.PRNGKey(0)
    kx, kp = jax.random.split(key)
    xs = jax.random.normal(kx, (seq_len, batch, input_dim), dtype=jnp.float32)
    wx, wh, b = init_params(kp, input_dim, hidden_dim)

    # Reference: per-step pure-JAX loop (start=True -> h = c = 0).
    h_ref = jnp.zeros((batch, hidden_dim), jnp.float32)
    c_ref = jnp.zeros((batch, hidden_dim), jnp.float32)
    for t in range(seq_len):
        h_ref, c_ref = reference_step(xs[t], h_ref, c_ref, wx, wh, b)

    # 1) f32 matmul path (semantics-preserving).  Tolerance is loose-ish only to
    #    absorb MXU f32 pass-strategy differences vs. the HIGHEST-precision ref.
    h32, c32 = lstm_forward(xs, wx, wh, b, matmul_dtype=jnp.float32)
    jax.block_until_ready((h32, c32))
    assert jnp.allclose(h32, h_ref, atol=5e-2, rtol=5e-2), "h mismatch (f32)"
    assert jnp.allclose(c32, c_ref, atol=5e-2, rtol=5e-2), "c mismatch (f32)"

    # 2) f32 path with small time chunks: exercises multi-chunk carry in the
    #    output refs and the ragged-tail masking (seq_len=8, Tc=3).
    h3, c3 = lstm_forward(xs, wx, wh, b, matmul_dtype=jnp.float32, time_chunk=3)
    jax.block_until_ready((h3, c3))
    assert jnp.allclose(h3, h_ref, atol=5e-2, rtol=5e-2), "h mismatch (chunk=3)"
    assert jnp.allclose(c3, c_ref, atol=5e-2, rtol=5e-2), "c mismatch (chunk=3)"

    # 3) Recommended perf path: bf16 matmul operands, f32 accumulate/elementwise.
    hbf, cbf = lstm_forward(xs, wx, wh, b, matmul_dtype=jnp.bfloat16)
    jax.block_until_ready((hbf, cbf))
    assert jnp.allclose(hbf, h_ref, atol=1e-1, rtol=1e-1), "h mismatch (bf16)"
    assert jnp.allclose(cbf, c_ref, atol=1e-1, rtol=1e-1), "c mismatch (bf16)"

    print("KERNEL_OK")
</pallas_src>

<mosaic_0001>
module attributes {stable_mosaic.version = 11 : i64} {
  func.func @_input_proj_kernel(%arg0: i32, %arg1: memref<64x16xf32, #tpu.memory_space<vmem>>, %arg2: memref<16x256xf32, #tpu.memory_space<vmem>>, %arg3: memref<1x256xf32, #tpu.memory_space<vmem>>, %arg4: memref<64x256xf32, #tpu.memory_space<vmem>>) attributes {dimension_semantics = [#tpu.dimension_semantics<parallel>], iteration_bounds = array<i64: 1>, scalar_prefetch = 0 : i64, scratch_operands = 0 : i64, tpu.core_type = #tpu.core_type<tc>, window_params = [{transform_indices = @transform_0, window_bounds = array<i64: 64, 16>}, {pipeline_mode = #tpu.pipeline_mode<synchronous>, transform_indices = @transform_1, window_bounds = array<i64: 16, 256>}, {pipeline_mode = #tpu.pipeline_mode<synchronous>, transform_indices = @transform_2, window_bounds = array<i64: 1, 256>}, {transform_indices = @transform_3, window_bounds = array<i64: 64, 256>}]} {
    %c0 = arith.constant 0 : index
    %c0_0 = arith.constant 0 : index
    %0 = vector.load %arg1[%c0, %c0_0] : memref<64x16xf32, #tpu.memory_space<vmem>>, vector<64x16xf32>
    %c0_1 = arith.constant 0 : index
    %c0_2 = arith.constant 0 : index
    %1 = vector.load %arg2[%c0_1, %c0_2] : memref<16x256xf32, #tpu.memory_space<vmem>>, vector<16x256xf32>
    %cst = arith.constant dense<0.000000e+00> : vector<64x256xf32>
    %2 = tpu.matmul %0, %1, %cst {dimension_numbers = #tpu.dot_dimension_numbers<[1], [0], [0], [1], [0, 0, 1, 1], [], []>} : vector<64x16xf32>, vector<16x256xf32>, vector<64x256xf32> -> vector<64x256xf32>
    %c0_3 = arith.constant 0 : index
    %c0_4 = arith.constant 0 : index
    %3 = vector.load %arg3[%c0_3, %c0_4] : memref<1x256xf32, #tpu.memory_space<vmem>>, vector<1x256xf32>
    %4 = vector.broadcast %3 : vector<1x256xf32> to vector<64x256xf32>
    %5 = arith.addf %2, %4 : vector<64x256xf32>
    %c0_5 = arith.constant 0 : index
    %c0_6 = arith.constant 0 : index
    %6 = vector.load %arg4[%c0_5, %c0_6] : memref<64x256xf32, #tpu.memory_space<vmem>>, vector<64x256xf32>
    tpu.vector_store %arg4[%c0_5, %c0_6], %5 {strides = array<i32>} : memref<64x256xf32, #tpu.memory_space<vmem>>, vector<64x256xf32>,
    return
  }
  func.func @transform_0(%arg0: i32) -> (i32, i32) {
    %c0_i32 = arith.constant 0 : i32
    %c0_i32_0 = arith.constant 0 : i32
    return %arg0, %c0_i32 : i32, i32
  }
  func.func @transform_1(%arg0: i32) -> (i32, i32) {
    %c0_i32 = arith.constant 0 : i32
    %c0_i32_0 = arith.constant 0 : i32
    %c0_i32_1 = arith.constant 0 : i32
    return %c0_i32, %c0_i32_0 : i32, i32
  }
  func.func @transform_2(%arg0: i32) -> (i32, i32) {
    %c0_i32 = arith.constant 0 : i32
    %c0_i32_0 = arith.constant 0 : i32
    %c0_i32_1 = arith.constant 0 : i32
    return %c0_i32, %c0_i32_0 : i32, i32
  }
  func.func @transform_3(%arg0: i32) -> (i32, i32) {
    %c0_i32 = arith.constant 0 : i32
    %c0_i32_0 = arith.constant 0 : i32
    return %arg0, %c0_i32 : i32, i32
  }
}

</mosaic_0001>

<llo_original>
// kernel: tpu_custom_call.1
$region0: #{tpu_custom_call.1}
  #allocation0 [shape = 'u32[]', space=smem, size = 0x4, offset = 0x4, fixed_abs, tag = 'smem constant byte address 0x4 - core index']
  #allocation1 [shape = 'u32[144,128]{1,0:T(1,128)}', space=vmem, size = 0x12000, scoped, tag = 'internal scratch']
  %s0 = inlined_call_operand.vmem [shape: f32[64,16], index: 0, kind: input, shape index: {}]
  %s1 = inlined_call_operand.vmem [shape: f32[16,256], index: 1, kind: input, shape index: {}]
  %s2 = inlined_call_operand.vmem [shape: f32[1,256], index: 2, kind: input, shape index: {}]
  %s3 = inlined_call_operand.hbm [shape: f32[64,256], index: 3, kind: output, shape index: {}]
  %s4 = sld [smem:[#allocation0]]
  $region22: #{tpu_custom_call.1} parent=0
    _
  %s6 = ssub.s32 1, %s4
  %s7 = scalar_select 0, %s6, %s4
  $region1: #{tpu_custom_call.1} parent=0
    #allocation2 [shape = 'u8[65536]{0}', space=vmem, size = 0x10000, scoped, tag = 'output window, operand 0, single buffered']
    #allocation3 [shape = 's32[1]{0}', space=sflag, size = 0x4, scoped, tag = 'scoped memory for tpu_custom_call.1']
    %8 = vsyncpa [#allocation3], 0
    // Predicated region
    $region2: #{tpu_custom_call.1} parent=1 // pred_check
      _
    $region3: #{tpu_custom_call.1} parent=1 // pred_check_branch
      %10 = sbr.rel (0) target = $region5
    $region4: #{tpu_custom_call.1} parent=1 // pred_region
      _
    $region5: #{tpu_custom_call.1} parent=1 // pred_fallthru
      _
    // Predicated region
    $region6: #{tpu_custom_call.1} parent=1 // pred_check
      _
    $region7: #{tpu_custom_call.1} parent=1 // pred_check_branch
      %12 = sbr.rel (0) target = $region9
    $region8: #{tpu_custom_call.1} parent=1 // pred_region
      _
    $region9: #{tpu_custom_call.1} parent=1 // pred_fallthru
      _
    // Predicated region
    $region10: #{tpu_custom_call.1} parent=1 // pred_check
      _
    $region11: #{tpu_custom_call.1} parent=1 // pred_check_branch
      %14 = sbr.rel (0) target = $region13
    $region12: #{tpu_custom_call.1} parent=1 // pred_region
      _
    $region13: #{tpu_custom_call.1} parent=1 // pred_fallthru
      _
    %v15 = vld [vmem:[%s0] sm:$0xff]
    %v16 = vld [vmem:[%s0 + $0x8] sm:$0xff]
    %v17 = vld [vmem:[%s0 + $0x10] sm:$0xff]
    %v18 = vld [vmem:[%s0 + $0x18] sm:$0xff]
    %v19 = vld [vmem:[%s0 + $0x20] sm:$0xff]
    %v20 = vld [vmem:[%s0 + $0x28] sm:$0xff]
    %v21 = vld [vmem:[%s0 + $0x30] sm:$0xff]
    %v22 = vld [vmem:[%s0 + $0x38] sm:$0xff]
    %v23 = vld [vmem:[%s1] sm:$0xff]
    %v24 = vld [vmem:[%s1 + $0x8] sm:$0xff]
    %v25 = vld [vmem:[%s1 + $0x10] sm:$0xff]
    %v26 = vld [vmem:[%s1 + $0x18] sm:$0xff]
    %v27 = vld [vmem:[%s2] sm:$0x3]
    %v29 = vlaneseq
    %v30 = vshrl.u32 %v29, 7
    %v31 = vsub.s32 0, %v30
    %v32 = vrot.slane %v27, %v31
    %v33 = vlaneseq
    %v34 = vshrl.u32 %v33, 7
    %v35 = vsub.s32 1, %v34
    %v36 = vrot.slane %v27, %v35
    %vm39 = vcmask 130048
    %v41 = vsel %vm39, %v15, 0
    %v44 = vsel %vm39, %v16, 0
    %v47 = vsel %vm39, %v17, 0
    %v50 = vsel %vm39, %v18, 0
    %v53 = vsel %vm39, %v19, 0
    %v56 = vsel %vm39, %v20, 0
    %v59 = vsel %vm39, %v21, 0
    %v62 = vsel %vm39, %v22, 0
    %64 = vmatprep.subr.mxu0 %v24
    %65 = vmatpush1.msra.mxu0 %v23
    %66 = vmatprep.subr.mxu0 %v26
    %67 = vmatpush1.msra.mxu0 %v25
    %68 = vmatprep.subr.mxu0 0.0
    %69 = vmatpush1.msra.mxu0 0.0
    %70 = vmatprep.subr.mxu0 0.0
    %71 = vmatpush1.msra.mxu0 0.0
    %72 = vmatprep.subr.mxu0 0.0
    %73 = vmatpush1.msra.mxu0 0.0
    %74 = vmatprep.subr.mxu0 0.0
    %75 = vmatpush1.msra.mxu0 0.0
    %76 = vmatprep.subr.mxu0 0.0
    %77 = vmatpush1.msra.mxu0 0.0
    %78 = vmatprep.subr.mxu0 0.0
    %79 = vmatpush1.msra.mxu0 0.0
    %80 = vmatprep.subr.mxu0 0.0
    %81 = vmatpush1.msra.mxu0 0.0
    %82 = vmatprep.subr.mxu0 0.0
    %83 = vmatpush1.msra.mxu0 0.0
    %84 = vmatprep.subr.mxu0 0.0
    %85 = vmatpush1.msra.mxu0 0.0
    %86 = vmatprep.subr.mxu0 0.0
    %87 = vmatpush1.msra.mxu0 0.0
    %88 = vmatprep.subr.mxu0 0.0
    %89 = vmatpush1.msra.mxu0 0.0
    %90 = vmatprep.subr.mxu0 0.0
    %91 = vmatpush1.msra.mxu0 0.0
    %92 = vmatprep.subr.mxu0 0.0
    %93 = vmatpush1.msra.mxu0 0.0
    %94 = vmatprep.subr.mxu0 0.0
    %95 = vmatpush1.msra.mxu0 0.0
    %96 = vmatprep.subr.mxu0 0.0
    %97 = vmatpush1.msra.mxu0 0.0
    %98 = vmatprep.subr.mxu0 0.0
    %99 = vmatpush1.msra.mxu0 0.0
    %100 = vmatprep.subr.mxu0 0.0
    %101 = vmatpush1.msra.mxu0 0.0
    %102 = vmatprep.subr.mxu0 0.0
    %103 = vmatpush1.msra.mxu0 0.0
    %104 = vmatprep.subr.mxu0 0.0
    %105 = vmatpush1.msra.mxu0 0.0
    %106 = vmatprep.subr.mxu0 0.0
    %107 = vmatpush1.msra.mxu0 0.0
    %108 = vmatprep.subr.mxu0 0.0
    %109 = vmatpush1.msra.mxu0 0.0
    %110 = vmatprep.subr.mxu0 0.0
    %111 = vmatpush1.msra.mxu0 0.0
    %112 = vmatprep.subr.mxu0 0.0
    %113 = vmatpush1.msra.mxu0 0.0
    %114 = vmatprep.subr.mxu0 0.0
    %115 = vmatpush1.msra.mxu0 0.0
    %116 = vmatprep.subr.mxu0 0.0
    %117 = vmatpush1.msra.mxu0 0.0
    %118 = vmatprep.subr.mxu0 0.0
    %119 = vmatpush1.msra.mxu0 0.0
    %120 = vmatprep.subr.mxu0 0.0
    %121 = vmatpush1.msra.mxu0 0.0
    %122 = vmatprep.subr.mxu0 0.0
    %123 = vmatpush1.msra.mxu0 0.0
    %124 = vmatprep.subr.mxu0 0.0
    %125 = vmatpush1.msra.mxu0 0.0
    %126 = vmatprep.subr.mxu0 0.0
    %127 = vmatpush1.msra.mxu0 0.0
    %128 = vmatprep.mubr.f32.mxu0 0.0
    %129 = vmatmul.mubr.f32.gmra.mrb[0].mxu0 %v41
    %v130 = vpop.f32.mrb[0].mxu0
    %v131 = vadd.f32 %v32, %v130
    %v132 = vpop.f32.mrb[0].mxu0
    %v133 = vadd.f32 %v36, %v132
    %134 = vmatprep.mubr.f32.mxu0 0.0
    %135 = vmatmul.mubr.f32.gmra.mrb[0].mxu0 %v44
    %v136 = vpop.f32.mrb[0].mxu0
    %v137 = vadd.f32 %v32, %v136
    %v138 = vpop.f32.mrb[0].mxu0
    %v139 = vadd.f32 %v36, %v138
    %140 = vmatprep.mubr.f32.mxu0 0.0
    %141 = vmatmul.mubr.f32.gmra.mrb[0].mxu0 %v47
    %v142 = vpop.f32.mrb[0].mxu0
    %v143 = vadd.f32 %v32, %v142
    %v144 = vpop.f32.mrb[0].mxu0
    %v145 = vadd.f32 %v36, %v144
    %146 = vmatprep.mubr.f32.mxu0 0.0
    %147 = vmatmul.mubr.f32.gmra.mrb[0].mxu0 %v50
    %v148 = vpop.f32.mrb[0].mxu0
    %v149 = vadd.f32 %v32, %v148
    %v150 = vpop.f32.mrb[0].mxu0
    %v151 = vadd.f32 %v36, %v150
    %152 = vmatprep.mubr.f32.mxu0 0.0
    %153 = vmatmul.mubr.f32.gmra.mrb[0].mxu0 %v53
    %v154 = vpop.f32.mrb[0].mxu0
    %v155 = vadd.f32 %v32, %v154
    %v156 = vpop.f32.mrb[0].mxu0
    %v157 = vadd.f32 %v36, %v156
    %158 = vmatprep.mubr.f32.mxu0 0.0
    %159 = vmatmul.mubr.f32.gmra.mrb[0].mxu0 %v56
    %v160 = vpop.f32.mrb[0].mxu0
    %v161 = vadd.f32 %v32, %v160
    %v162 = vpop.f32.mrb[0].mxu0
    %v163 = vadd.f32 %v36, %v162
    %164 = vmatprep.mubr.f32.mxu0 0.0
    %165 = vmatmul.mubr.f32.gmra.mrb[0].mxu0 %v59
    %v166 = vpop.f32.mrb[0].mxu0
    %v167 = vadd.f32 %v32, %v166
    %v168 = vpop.f32.mrb[0].mxu0
    %v169 = vadd.f32 %v36, %v168
    %170 = vmatprep.mubr.f32.mxu0 0.0
    %171 = vmatmul.mubr.f32.gmra.mrb[0].mxu0 %v62
    %v172 = vpop.f32.mrb[0].mxu0
    %v173 = vadd.f32 %v32, %v172
    %v174 = vpop.f32.mrb[0].mxu0
    %v175 = vadd.f32 %v36, %v174
    %176 = vdwg.mxu0
    %177 = vst [vmem:[#allocation2] sm:$0xff] %v131
    %178 = vst [vmem:[#allocation2 + $0x8] sm:$0xff] %v133
    %179 = vst [vmem:[#allocation2 + $0x10] sm:$0xff] %v137
    %180 = vst [vmem:[#allocation2 + $0x18] sm:$0xff] %v139
    %181 = vst [vmem:[#allocation2 + $0x20] sm:$0xff] %v143
    %182 = vst [vmem:[#allocation2 + $0x28] sm:$0xff] %v145
    %183 = vst [vmem:[#allocation2 + $0x30] sm:$0xff] %v149
    %184 = vst [vmem:[#allocation2 + $0x38] sm:$0xff] %v151
    %185 = vst [vmem:[#allocation2 + $0x40] sm:$0xff] %v155
    %186 = vst [vmem:[#allocation2 + $0x48] sm:$0xff] %v157
    %187 = vst [vmem:[#allocation2 + $0x50] sm:$0xff] %v161
    %188 = vst [vmem:[#allocation2 + $0x58] sm:$0xff] %v163
    %189 = vst [vmem:[#allocation2 + $0x60] sm:$0xff] %v167
    %190 = vst [vmem:[#allocation2 + $0x68] sm:$0xff] %v169
    %191 = vst [vmem:[#allocation2 + $0x70] sm:$0xff] %v173
    %192 = vst [vmem:[#allocation2 + $0x78] sm:$0xff] %v175
    // Predicated region
    $region14: #{tpu_custom_call.1} parent=1 // pred_check
      _
    $region15: #{tpu_custom_call.1} parent=1 // pred_check_branch
      %194 = sbr.rel (0) target = $region17
    $region16: #{tpu_custom_call.1} parent=1 // pred_region
      %s196 = ssub.s32 2048, 2048
      %197 = vsyncadd [#allocation3], %s196
      %s198 = sshll.u32 [#allocation2], 4
      %s199 = int_to_ptr.vmem [resolvable:$true] %s198
      %204 = dma.vmem_to_hbm [thread:$0]  %s199, 2048, %s3, [#allocation3], 256, 256, 16
    $region17: #{tpu_custom_call.1} parent=1 // pred_fallthru
      _
    // Predicated region
    $region18: #{tpu_custom_call.1} parent=1 // pred_check
      _
    $region19: #{tpu_custom_call.1} parent=1 // pred_check_branch
      %206 = sbr.rel (0) target = $region21
    $region20: #{tpu_custom_call.1} parent=1 // pred_region
      %207 = dma.done [#allocation3], 2048
    $region21: #{tpu_custom_call.1} parent=1 // pred_fallthru
      _
    %208 = vsyncpa [#allocation3], 1

</llo_original>
